<compile_context>
chip_gen: v6e
topology: v6e:2x2x1
jax: 0.10.0
libtpu: 0.0.40
codegen_flags: <defaults>
</compile_context>

<pallas_src>
import jax
import jax.numpy as jnp
from jax.experimental import pallas as pl
from jax.experimental.pallas import tpu as pltpu

LANE = 128
SUBLANE = 8


# ------------------------------ kernel ---------------------------------------

def _gelu_exact(x):
    # PyTorch F.gelu default = exact (erf) variant.
    return 0.5 * x * (1.0 + jax.lax.erf(x * (2.0 ** -0.5)))


def _combiner_kernel(x_ref, w_ref, b_ref, o_ref):
    # Fused combiner: out = gelu(x @ (Wtt.T @ Mixing) + b_tt @ Mixing)
    h = jnp.dot(x_ref[...], w_ref[...],
                preferred_element_type=jnp.float32) + b_ref[...]
    o_ref[...] = _gelu_exact(h).astype(o_ref.dtype)


# ------------------------------ wrapper ---------------------------------------

def _round_up(x, m):
    return (x + m - 1) // m * m


def quantum_feature_combiner(x, params, *, tile_m=512):
    """x: (..., dim) float32. Returns gelu((x @ Wtt.T + b) @ Mixing), same shape."""
    orig_shape = x.shape
    dim = orig_shape[-1]
    w = params["w_fused"]           # (dim_pad, dim_pad), lane-dense
    b = params["b_fused"]           # (1, dim_pad)
    dim_pad = w.shape[0]

    x2d = x.reshape(-1, dim).astype(jnp.float32)
    M = x2d.shape[0]

    # lane-dense pad of the activation feature axis (zero cols -> exact result)
    if dim_pad != dim:
        x2d = jnp.pad(x2d, ((0, 0), (0, dim_pad - dim)))

    # row tiling: TILE_M rows per grid step (multiple of the 8-row sublane tile)
    tm = min(tile_m, _round_up(M, SUBLANE))
    m_pad = _round_up(M, tm)
    if m_pad != M:
        x2d = jnp.pad(x2d, ((0, m_pad - M), (0, 0)))

    out = pl.pallas_call(
        _combiner_kernel,
        grid=(m_pad // tm,),
        in_specs=[
            pl.BlockSpec((tm, dim_pad), lambda i: (i, 0)),       # activations
            pl.BlockSpec((dim_pad, dim_pad), lambda i: (0, 0)),  # fused weight (resident)
            pl.BlockSpec((1, dim_pad), lambda i: (0, 0)),        # fused bias (resident)
        ],
        out_specs=pl.BlockSpec((tm, dim_pad), lambda i: (i, 0)),
        out_shape=jax.ShapeDtypeStruct((m_pad, dim_pad), jnp.float32),
        compiler_params=pltpu.CompilerParams(
            dimension_semantics=("parallel",)),
    )(x2d, w, b)

    return out[:M, :dim].reshape(orig_shape)


# --------------------------- parameter init ----------------------------------

def _orthogonal(key, n):
    a = jax.random.normal(key, (n, n), dtype=jnp.float32)
    q, r = jnp.linalg.qr(a)
    return q * jnp.sign(jnp.diagonal(r))[None, :]


def init_params(key, dim):
    k1, k2, k3, k4 = jax.random.split(key, 4)

    # TODO(synk): TensorTrain class is not defined in the reference source;
    # synthesize an equivalent rank-4 factored weight Wtt = A @ B.
    A = jax.random.normal(k1, (dim, 4), jnp.float32) * 0.1
    Bc = jax.random.normal(k2, (4, dim), jnp.float32) * 0.1
    Wtt = A @ Bc                                      # (out_features, in_features)
    b_tt = jax.random.normal(k3, (dim,), jnp.float32) * 0.02
    mixing = _orthogonal(k4, dim)                     # nn.init.orthogonal_(mixing)

    # Algebraic fold (done ONCE at init):
    #   (x @ Wtt.T + b) @ Mixing == x @ (Wtt.T @ Mixing) + b @ Mixing
    w_fused = Wtt.T @ mixing                          # (in, out)
    b_fused = b_tt[None, :] @ mixing                  # (1, out)

    # Lane-dense padding of the feature axis to a multiple of 128.
    dim_pad = _round_up(dim, LANE)
    pad = dim_pad - dim
    w_fused = jnp.pad(w_fused, ((0, pad), (0, pad)))
    b_fused = jnp.pad(b_fused, ((0, 0), (0, pad)))

    return {
        "w_fused": w_fused,
        "b_fused": b_fused,
        # unfused copies kept only for the reference check in __main__
        "Wtt": Wtt, "b_tt": b_tt, "mixing": mixing,
    }


# --------------------------------- main ---------------------------------------

if __name__ == "__main__":
    key = jax.random.PRNGKey(0)
    B, S, dim = 2, 8, 32                      # small shapes: batch=2, seq=8, hidden=32
    kx, kp = jax.random.split(key)

    x = jax.random.normal(kx, (B, S, dim), jnp.float32)
    params = init_params(kp, dim)

    out = quantum_feature_combiner(x, params)
    out = jax.block_until_ready(out)
    assert out.shape == (B, S, dim)

    # Pure-JAX reference of the ORIGINAL (unfused) forward to verify the fold.
    hp = jax.lax.Precision.HIGHEST
    proj = jnp.einsum("bsi,oi->bso", x, params["Wtt"], precision=hp) + params["b_tt"]
    ref = _gelu_exact(jnp.einsum("bso,od->bsd", proj, params["mixing"], precision=hp))
    assert bool(jnp.allclose(out, ref, atol=1e-3, rtol=1e-3))

    print("KERNEL_OK")
</pallas_src>

<mosaic_0001>
module attributes {stable_mosaic.version = 11 : i64} {
  func.func @_combiner_kernel(%arg0: i32, %arg1: memref<16x128xf32, #tpu.memory_space<vmem>>, %arg2: memref<128x128xf32, #tpu.memory_space<vmem>>, %arg3: memref<1x128xf32, #tpu.memory_space<vmem>>, %arg4: memref<16x128xf32, #tpu.memory_space<vmem>>) attributes {dimension_semantics = [#tpu.dimension_semantics<parallel>], iteration_bounds = array<i64: 1>, scalar_prefetch = 0 : i64, scratch_operands = 0 : i64, tpu.core_type = #tpu.core_type<tc>, window_params = [{transform_indices = @transform_0, window_bounds = array<i64: 16, 128>}, {pipeline_mode = #tpu.pipeline_mode<synchronous>, transform_indices = @transform_1, window_bounds = array<i64: 128, 128>}, {pipeline_mode = #tpu.pipeline_mode<synchronous>, transform_indices = @transform_2, window_bounds = array<i64: 1, 128>}, {transform_indices = @transform_3, window_bounds = array<i64: 16, 128>}]} {
    %c0 = arith.constant 0 : index
    %c0_0 = arith.constant 0 : index
    %0 = vector.load %arg1[%c0, %c0_0] : memref<16x128xf32, #tpu.memory_space<vmem>>, vector<16x128xf32>
    %c0_1 = arith.constant 0 : index
    %c0_2 = arith.constant 0 : index
    %1 = vector.load %arg2[%c0_1, %c0_2] : memref<128x128xf32, #tpu.memory_space<vmem>>, vector<128x128xf32>
    %cst = arith.constant dense<0.000000e+00> : vector<16x128xf32>
    %2 = tpu.matmul %0, %1, %cst {dimension_numbers = #tpu.dot_dimension_numbers<[1], [0], [0], [1], [0, 0, 1, 1], [], []>} : vector<16x128xf32>, vector<128x128xf32>, vector<16x128xf32> -> vector<16x128xf32>
    %c0_3 = arith.constant 0 : index
    %c0_4 = arith.constant 0 : index
    %3 = vector.load %arg3[%c0_3, %c0_4] : memref<1x128xf32, #tpu.memory_space<vmem>>, vector<1x128xf32>
    %4 = vector.broadcast %3 : vector<1x128xf32> to vector<16x128xf32>
    %5 = arith.addf %2, %4 : vector<16x128xf32>
    %cst_5 = arith.constant 5.000000e-01 : f32
    %6 = vector.broadcast %cst_5 : f32 to vector<16x128xf32>
    %7 = arith.mulf %6, %5 : vector<16x128xf32>
    %cst_6 = arith.constant 0.707106769 : f32
    %8 = vector.broadcast %cst_6 : f32 to vector<16x128xf32>
    %9 = arith.mulf %5, %8 : vector<16x128xf32>
    %10 = math.erf %9 : vector<16x128xf32>
    %cst_7 = arith.constant 1.000000e+00 : f32
    %11 = vector.broadcast %cst_7 : f32 to vector<16x128xf32>
    %12 = arith.addf %11, %10 : vector<16x128xf32>
    %13 = arith.mulf %7, %12 : vector<16x128xf32>
    %c0_8 = arith.constant 0 : index
    %c0_9 = arith.constant 0 : index
    %14 = vector.load %arg4[%c0_8, %c0_9] : memref<16x128xf32, #tpu.memory_space<vmem>>, vector<16x128xf32>
    tpu.vector_store %arg4[%c0_8, %c0_9], %13 {strides = array<i32>} : memref<16x128xf32, #tpu.memory_space<vmem>>, vector<16x128xf32>,
    return
  }
  func.func @transform_0(%arg0: i32) -> (i32, i32) {
    %c0_i32 = arith.constant 0 : i32
    %c0_i32_0 = arith.constant 0 : i32
    return %arg0, %c0_i32 : i32, i32
  }
  func.func @transform_1(%arg0: i32) -> (i32, i32) {
    %c0_i32 = arith.constant 0 : i32
    %c0_i32_0 = arith.constant 0 : i32
    %c0_i32_1 = arith.constant 0 : i32
    return %c0_i32, %c0_i32_0 : i32, i32
  }
  func.func @transform_2(%arg0: i32) -> (i32, i32) {
    %c0_i32 = arith.constant 0 : i32
    %c0_i32_0 = arith.constant 0 : i32
    %c0_i32_1 = arith.constant 0 : i32
    return %c0_i32, %c0_i32_0 : i32, i32
  }
  func.func @transform_3(%arg0: i32) -> (i32, i32) {
    %c0_i32 = arith.constant 0 : i32
    %c0_i32_0 = arith.constant 0 : i32
    return %arg0, %c0_i32 : i32, i32
  }
}

</mosaic_0001>

<llo_original>
// kernel: tpu_custom_call.1
$region0: #{tpu_custom_call.1}
  #allocation0 [shape = 'u32[]', space=smem, size = 0x4, offset = 0x4, fixed_abs, tag = 'smem constant byte address 0x4 - core index']
  #allocation1 [shape = 'u32[144,128]{1,0:T(1,128)}', space=vmem, size = 0x12000, scoped, tag = 'internal scratch']
  %s0 = inlined_call_operand.hbm [shape: f32[16,128], index: 0, kind: input, shape index: {}]
  %s1 = inlined_call_operand.hbm [shape: f32[128,128], index: 1, kind: input, shape index: {}]
  %s2 = inlined_call_operand.vmem [shape: f32[1,128], index: 2, kind: input, shape index: {}]
  %s3 = inlined_call_operand.hbm [shape: f32[16,128], index: 3, kind: output, shape index: {}]
  %s4 = sld [smem:[#allocation0]]
  $region30: #{tpu_custom_call.1} parent=0
    _
  %s6 = ssub.s32 1, %s4
  %s7 = scalar_select 0, %s6, %s4
  $region1: #{tpu_custom_call.1} parent=0
    #allocation2 [shape = 'u8[8192]{0}', space=vmem, size = 0x2000, scoped, tag = 'input window, operand 0, single buffered']
    #allocation3 [shape = 's32[1]{0}', space=sflag, size = 0x4, scoped, tag = 'scoped memory for tpu_custom_call.1']
    #allocation4 [shape = 's32[1]{0}', space=sflag, size = 0x4, scoped, tag = 'scoped memory for tpu_custom_call.1']
    #allocation5 [shape = 'u8[65536]{0}', space=vmem, size = 0x10000, scoped, tag = 'input window, operand 1, single buffered']
    #allocation6 [shape = 's32[1]{0}', space=sflag, size = 0x4, scoped, tag = 'scoped memory for tpu_custom_call.1']
    #allocation7 [shape = 'u8[8192]{0}', space=vmem, size = 0x2000, scoped, tag = 'output window, operand 0, single buffered']
    %8 = vsyncpa [#allocation3], 0
    %9 = vsyncpa [#allocation6], 0
    %10 = vsyncpa [#allocation4], 0
    // Predicated region
    $region2: #{tpu_custom_call.1} parent=1 // pred_check
      _
    $region3: #{tpu_custom_call.1} parent=1 // pred_check_branch
      %12 = sbr.rel (0) target = $region5
    $region4: #{tpu_custom_call.1} parent=1 // pred_region
      %s14 = ssub.s32 256, 256
      %15 = vsyncadd [#allocation3], %s14
      %s16 = sshll.u32 [#allocation2], 4
      %s17 = int_to_ptr.vmem [resolvable:$true] %s16
      %22 = dma.hbm_to_vmem [thread:$0]  %s0, 256, %s17, [#allocation3], 128, 128, 8
    $region5: #{tpu_custom_call.1} parent=1 // pred_fallthru
      _
    // Predicated region
    $region6: #{tpu_custom_call.1} parent=1 // pred_check
      _
    $region7: #{tpu_custom_call.1} parent=1 // pred_check_branch
      %24 = sbr.rel (0) target = $region9
    $region8: #{tpu_custom_call.1} parent=1 // pred_region
      %s26 = ssub.s32 2048, 2048
      %27 = vsyncadd [#allocation6], %s26
      %s28 = sshll.u32 [#allocation5], 4
      %s29 = int_to_ptr.vmem [resolvable:$true] %s28
      %34 = dma.hbm_to_vmem [thread:$0]  %s1, 2048, %s29, [#allocation6], 128, 128, 8
    $region9: #{tpu_custom_call.1} parent=1 // pred_fallthru
      _
    // Predicated region
    $region10: #{tpu_custom_call.1} parent=1 // pred_check
      _
    $region11: #{tpu_custom_call.1} parent=1 // pred_check_branch
      %36 = sbr.rel (0) target = $region13
    $region12: #{tpu_custom_call.1} parent=1 // pred_region
      _
    $region13: #{tpu_custom_call.1} parent=1 // pred_fallthru
      _
    // Predicated region
    $region14: #{tpu_custom_call.1} parent=1 // pred_check
      _
    $region15: #{tpu_custom_call.1} parent=1 // pred_check_branch
      %38 = sbr.rel (0) target = $region17
    $region16: #{tpu_custom_call.1} parent=1 // pred_region
      %39 = dma.done [#allocation3], 256
    $region17: #{tpu_custom_call.1} parent=1 // pred_fallthru
      _
    // Predicated region
    $region18: #{tpu_custom_call.1} parent=1 // pred_check
      _
    $region19: #{tpu_custom_call.1} parent=1 // pred_check_branch
      %41 = sbr.rel (0) target = $region21
    $region20: #{tpu_custom_call.1} parent=1 // pred_region
      %42 = dma.done [#allocation6], 2048
    $region21: #{tpu_custom_call.1} parent=1 // pred_fallthru
      _
    %v43 = vld [vmem:[#allocation2] sm:$0xff]
    %v44 = vld [vmem:[#allocation2 + $0x8] sm:$0xff]
    %v45 = vld [vmem:[#allocation5] sm:$0xff]
    %v46 = vld [vmem:[#allocation5 + $0x8] sm:$0xff]
    %v47 = vld [vmem:[#allocation5 + $0x10] sm:$0xff]
    %v48 = vld [vmem:[#allocation5 + $0x18] sm:$0xff]
    %v49 = vld [vmem:[#allocation5 + $0x20] sm:$0xff]
    %v50 = vld [vmem:[#allocation5 + $0x28] sm:$0xff]
    %v51 = vld [vmem:[#allocation5 + $0x30] sm:$0xff]
    %v52 = vld [vmem:[#allocation5 + $0x38] sm:$0xff]
    %v53 = vld [vmem:[#allocation5 + $0x40] sm:$0xff]
    %v54 = vld [vmem:[#allocation5 + $0x48] sm:$0xff]
    %v55 = vld [vmem:[#allocation5 + $0x50] sm:$0xff]
    %v56 = vld [vmem:[#allocation5 + $0x58] sm:$0xff]
    %v57 = vld [vmem:[#allocation5 + $0x60] sm:$0xff]
    %v58 = vld [vmem:[#allocation5 + $0x68] sm:$0xff]
    %v59 = vld [vmem:[#allocation5 + $0x70] sm:$0xff]
    %v60 = vld [vmem:[#allocation5 + $0x78] sm:$0xff]
    %v61 = vld [vmem:[%s2] sm:$0x1]
    %v63 = vlaneseq
    %v64 = vshrl.u32 %v63, 7
    %v65 = vsub.s32 0, %v64
    %v66 = vrot.slane %v61, %v65
    %68 = vmatprep.subr.mxu0 0.0
    %69 = vmatpush1.msra.mxu0 %v60
    %70 = vmatprep.subr.mxu0 0.0
    %71 = vmatpush1.msra.mxu0 %v59
    %72 = vmatprep.subr.mxu0 0.0
    %73 = vmatpush1.msra.mxu0 %v58
    %74 = vmatprep.subr.mxu0 0.0
    %75 = vmatpush1.msra.mxu0 %v57
    %76 = vmatprep.subr.mxu0 0.0
    %77 = vmatpush1.msra.mxu0 %v56
    %78 = vmatprep.subr.mxu0 0.0
    %79 = vmatpush1.msra.mxu0 %v55
    %80 = vmatprep.subr.mxu0 0.0
    %81 = vmatpush1.msra.mxu0 %v54
    %82 = vmatprep.subr.mxu0 0.0
    %83 = vmatpush1.msra.mxu0 %v53
    %84 = vmatprep.subr.mxu0 0.0
    %85 = vmatpush1.msra.mxu0 %v52
    %86 = vmatprep.subr.mxu0 0.0
    %87 = vmatpush1.msra.mxu0 %v51
    %88 = vmatprep.subr.mxu0 0.0
    %89 = vmatpush1.msra.mxu0 %v50
    %90 = vmatprep.subr.mxu0 0.0
    %91 = vmatpush1.msra.mxu0 %v49
    %92 = vmatprep.subr.mxu0 0.0
    %93 = vmatpush1.msra.mxu0 %v48
    %94 = vmatprep.subr.mxu0 0.0
    %95 = vmatpush1.msra.mxu0 %v47
    %96 = vmatprep.subr.mxu0 0.0
    %97 = vmatpush1.msra.mxu0 %v46
    %98 = vmatprep.subr.mxu0 0.0
    %99 = vmatpush1.msra.mxu0 %v45
    %100 = vmatprep.subr.mxu0 0.0
    %101 = vmatpush2.msra.mxu0 0.0
    %102 = vmatprep.subr.mxu0 0.0
    %103 = vmatpush2.msra.mxu0 0.0
    %104 = vmatprep.subr.mxu0 0.0
    %105 = vmatpush2.msra.mxu0 0.0
    %106 = vmatprep.subr.mxu0 0.0
    %107 = vmatpush2.msra.mxu0 0.0
    %108 = vmatprep.subr.mxu0 0.0
    %109 = vmatpush2.msra.mxu0 0.0
    %110 = vmatprep.subr.mxu0 0.0
    %111 = vmatpush2.msra.mxu0 0.0
    %112 = vmatprep.subr.mxu0 0.0
    %113 = vmatpush2.msra.mxu0 0.0
    %114 = vmatprep.subr.mxu0 0.0
    %115 = vmatpush2.msra.mxu0 0.0
    %116 = vmatprep.subr.mxu0 0.0
    %117 = vmatpush2.msra.mxu0 0.0
    %118 = vmatprep.subr.mxu0 0.0
    %119 = vmatpush2.msra.mxu0 0.0
    %120 = vmatprep.subr.mxu0 0.0
    %121 = vmatpush2.msra.mxu0 0.0
    %122 = vmatprep.subr.mxu0 0.0
    %123 = vmatpush2.msra.mxu0 0.0
    %124 = vmatprep.subr.mxu0 0.0
    %125 = vmatpush2.msra.mxu0 0.0
    %126 = vmatprep.subr.mxu0 0.0
    %127 = vmatpush2.msra.mxu0 0.0
    %128 = vmatprep.subr.mxu0 0.0
    %129 = vmatpush2.msra.mxu0 0.0
    %130 = vmatprep.subr.mxu0 0.0
    %131 = vmatpush2.msra.mxu0 0.0
    %132 = vmatprep.mubr.f32.mxu0 0.0
    %133 = vmatmul.mubr.f32.gmra.mxu0 %v43
    %v134 = vpop.f32.mrf.mxu0
    %v135 = vadd.f32 %v66, %v134
    %v136 = vpop.f32.mrf.mxu0
    %137 = vmatprep.mubr.f32.mxu0 0.0
    %138 = vmatmul.mubr.f32.gmra.mxu0 %v44
    %v139 = vpop.f32.mrf.mxu0
    %v140 = vadd.f32 %v66, %v139
    %v141 = vpop.f32.mrf.mxu0
    %142 = vdwg.mxu0
    %v143 = vmul.f32 %v135, 0.5
    %v144 = vmul.f32 %v140, 0.5
    %v145 = vmul.f32 %v135, 0.70710677
    %v146 = vmul.f32 %v140, 0.70710677
    %v147 = verf.f32.pop %v145
    %v148 = verf.f32.pop %v146
    %v149 = vadd.f32 %v147, 1.0
    %v150 = vadd.f32 %v148, 1.0
    %v151 = vmul.f32 %v143, %v149
    %v152 = vmul.f32 %v144, %v150
    %153 = vst [vmem:[#allocation7] sm:$0xff] %v151
    %154 = vst [vmem:[#allocation7 + $0x8] sm:$0xff] %v152
    // Predicated region
    $region22: #{tpu_custom_call.1} parent=1 // pred_check
      _
    $region23: #{tpu_custom_call.1} parent=1 // pred_check_branch
      %156 = sbr.rel (0) target = $region25
    $region24: #{tpu_custom_call.1} parent=1 // pred_region
      %s158 = ssub.s32 256, 256
      %159 = vsyncadd [#allocation4], %s158
      %s160 = sshll.u32 [#allocation7], 4
      %s161 = int_to_ptr.vmem [resolvable:$true] %s160
      %166 = dma.vmem_to_hbm [thread:$0]  %s161, 256, %s3, [#allocation4], 128, 128, 8
    $region25: #{tpu_custom_call.1} parent=1 // pred_fallthru
      _
    // Predicated region
    $region26: #{tpu_custom_call.1} parent=1 // pred_check
      _
    $region27: #{tpu_custom_call.1} parent=1 // pred_check_branch
      %168 = sbr.rel (0) target = $region29
    $region28: #{tpu_custom_call.1} parent=1 // pred_region
      %169 = dma.done [#allocation4], 256
    $region29: #{tpu_custom_call.1} parent=1 // pred_fallthru
      _
    %170 = vsyncpa [#allocation3], 1
    %171 = vsyncpa [#allocation6], 1
    %172 = vsyncpa [#allocation4], 1

</llo_original>
